<compile_context>
chip_gen: v5e
topology: v5e:2x2
jax: 0.10.0
libtpu: 0.0.40
codegen_flags: <defaults>
</compile_context>

<pallas_src>
import functools
import math

import jax
import jax.numpy as jnp
from jax.experimental import pallas as pl
from jax.experimental.pallas import tpu as pltpu


# ----------------------------------------------------------------------------
# Kernels
# ----------------------------------------------------------------------------
def _if_snn_kernel(x_ref, o_ref, *, thresh, T):
    """SRP spiking forward: x_ref / o_ref blocks are (T, bm, 128)."""
    thre = thresh  # compile-time float constant

    mem = jnp.full(x_ref.shape[1:], 0.5 * thre, dtype=jnp.float32)
    spike_count = jnp.zeros(x_ref.shape[1:], dtype=jnp.float32)

    # Integrate-and-fire: stream spikes straight into o_ref (no T-long list).
    for t in range(T):  # T is small & static: unrolled
        mem = mem + x_ref[t]
        spike = (mem - thre >= 0.0).astype(jnp.float32)
        mem = mem - spike * thre
        spike_count = spike_count + spike
        o_ref[t] = spike

    # SRP compensation (same op order as the PyTorch reference).
    compen_mem = mem - 0.5 * thre
    compen_value = compen_mem + spike_count * thre
    compen_value = jnp.minimum(compen_value, T * thre)
    # Guard the divide so spike_count == 0 never produces inf/nan (the result
    # for those elements is masked by the where anyway).
    new_thre = jnp.where(
        (compen_value > 0.0) & (spike_count > 0.0),
        compen_value / jnp.maximum(spike_count, 1.0),
        jnp.zeros_like(compen_mem),
    )

    # Second pass: rescale the stored spikes in-place (VMEM-only traffic).
    for t in range(T):
        o_ref[t] = o_ref[t] * new_thre


def _if_qcfs_kernel(x_ref, o_ref, *, thresh, L):
    """ANN QCFS quantizer: x_ref / o_ref blocks are (bm, 128)."""
    inv_thresh = 1.0 / thresh
    inv_L = 1.0 / L
    x = x_ref[...] * inv_thresh
    x = jnp.clip(x, 0.0, 1.0)
    x = jnp.floor(x * L + 0.5) * inv_L
    o_ref[...] = x * thresh


# ----------------------------------------------------------------------------
# Tiling helper
# ----------------------------------------------------------------------------
def _pick_bm(M, bytes_per_row, target, *, block_budget_bytes=2 << 20, min_grid=8):
    """Pick a row-tile size: big (amortize per-step overhead), VMEM-budgeted,
    leaving >= ~min_grid grid steps (v7x megacore), sublane-aligned."""
    bm = min(target, max(8, block_budget_bytes // max(1, bytes_per_row)))
    bm = min(bm, max(8, -(-M // min_grid)))
    bm = max(8, (bm // 8) * 8)
    return bm


# ----------------------------------------------------------------------------
# Wrappers
# ----------------------------------------------------------------------------
def if_forward_snn(x, thresh, T, *, bm_target=512):
    """x: [T*B, C, H, W] float32 (merged temporal dim, NCHW). Returns same shape."""
    thresh = float(thresh)
    TB = x.shape[0]
    assert TB % T == 0, "leading dim must be divisible by T"

    x_flat = x.reshape(T, -1).astype(jnp.float32)  # (T, N)
    N = x_flat.shape[1]
    M = pl.cdiv(N, 128)

    bm = _pick_bm(M, bytes_per_row=T * 128 * 4, target=bm_target)
    M_pad = pl.cdiv(M, bm) * bm
    N_pad = M_pad * 128
    if N_pad != N:
        x_flat = jnp.pad(x_flat, ((0, 0), (0, N_pad - N)))
    x_tiles = x_flat.reshape(T, M_pad, 128)

    grid = (M_pad // bm,)
    cost = pl.CostEstimate(
        flops=int(N_pad * (6 * T + 10)),
        transcendentals=0,
        bytes_accessed=int(2 * T * N_pad * 4),
    )

    out = pl.pallas_call(
        functools.partial(_if_snn_kernel, thresh=thresh, T=T),
        out_shape=jax.ShapeDtypeStruct((T, M_pad, 128), jnp.float32),
        grid=grid,
        in_specs=[pl.BlockSpec((T, bm, 128), lambda i: (0, i, 0))],
        out_specs=pl.BlockSpec((T, bm, 128), lambda i: (0, i, 0)),
        compiler_params=pltpu.CompilerParams(
            dimension_semantics=("parallel",)),
        cost_estimate=cost,
    )(x_tiles)

    out = out.reshape(T, N_pad)[:, :N]
    return out.reshape(x.shape)


def if_forward_qcfs(x, thresh, L, *, bm_target=2048):
    """x: [B, C, H, W] float32. Returns same shape (QCFS quantization)."""
    thresh = float(thresh)
    L = float(L)

    orig_shape = x.shape
    x_flat = x.reshape(-1).astype(jnp.float32)
    N = x_flat.shape[0]
    M = pl.cdiv(N, 128)

    bm = _pick_bm(M, bytes_per_row=128 * 4, target=bm_target)
    M_pad = pl.cdiv(M, bm) * bm
    N_pad = M_pad * 128
    if N_pad != N:
        x_flat = jnp.pad(x_flat, (0, N_pad - N))
    x_tiles = x_flat.reshape(M_pad, 128)

    grid = (M_pad // bm,)
    cost = pl.CostEstimate(
        flops=int(6 * N_pad),
        transcendentals=0,
        bytes_accessed=int(2 * N_pad * 4),
    )

    out = pl.pallas_call(
        functools.partial(_if_qcfs_kernel, thresh=thresh, L=L),
        out_shape=jax.ShapeDtypeStruct((M_pad, 128), jnp.float32),
        grid=grid,
        in_specs=[pl.BlockSpec((bm, 128), lambda i: (i, 0))],
        out_specs=pl.BlockSpec((bm, 128), lambda i: (i, 0)),
        compiler_params=pltpu.CompilerParams(
            dimension_semantics=("parallel",)),
        cost_estimate=cost,
    )(x_tiles)

    return out.reshape(-1)[:N].reshape(orig_shape)


# ----------------------------------------------------------------------------
# Pure-JAX references (for correctness checking)
# ----------------------------------------------------------------------------
def _ref_snn(x, thresh, T):
    TB = x.shape[0]
    B = TB // T
    xs = x.reshape((T, B) + x.shape[1:])
    thre = thresh
    mem = 0.5 * thre
    spikes = []
    for t in range(T):
        mem = mem + xs[t]
        spike = (mem - thre >= 0).astype(jnp.float32)
        mem = mem - spike * thre
        spikes.append(spike)
    spike_count = jnp.stack(spikes, 0).sum(0)
    compen_mem = mem - thre / 2
    compen_value = jnp.minimum(compen_mem + spike_count * thre, T * thre)
    new_thre = jnp.where((compen_value > 0) & (spike_count > 0),
                         compen_value / jnp.maximum(spike_count, 1.0),
                         jnp.zeros_like(compen_mem))
    out = jnp.stack([s * new_thre for s in spikes], 0)
    return out.reshape((T * B,) + x.shape[1:])


def _ref_qcfs(x, thresh, L):
    y = jnp.clip(x / thresh, 0.0, 1.0)
    y = jnp.floor(y * L + 0.5) / L
    return y * thresh


# ----------------------------------------------------------------------------
if __name__ == "__main__":
    key = jax.random.PRNGKey(0)
    k1, k2 = jax.random.split(key)

    # Module parameters (deterministic, per __init__ defaults)
    thresh = 8.0
    L = 8
    T = 4

    # SNN path: x is [T*B, C, H, W] (merged temporal dim)
    B, C, H, W = 2, 4, 16, 16
    x_snn = jax.random.normal(k1, (T * B, C, H, W), dtype=jnp.float32) * 4.0

    y_snn = if_forward_snn(x_snn, thresh, T)
    jax.block_until_ready(y_snn)
    ref_snn = _ref_snn(x_snn, thresh, T)
    assert y_snn.shape == x_snn.shape
    assert jnp.allclose(y_snn, ref_snn, atol=1e-5, rtol=1e-5), "SNN path mismatch"

    # ANN (QCFS) path: T == 0
    x_ann = jax.random.normal(k2, (B, C, H, W), dtype=jnp.float32) * 4.0
    y_ann = if_forward_qcfs(x_ann, thresh, L)
    jax.block_until_ready(y_ann)
    ref_ann = _ref_qcfs(x_ann, thresh, L)
    assert y_ann.shape == x_ann.shape
    assert jnp.allclose(y_ann, ref_ann, atol=1e-5, rtol=1e-5), "QCFS path mismatch"

    # TODO(synk): backward (ZIF surrogate gradient / GradFloor STE) not
    # implemented; this covers the inference forward pass only.
    print("KERNEL_OK")
</pallas_src>

<mosaic_0001>
module attributes {stable_mosaic.version = 11 : i64} {
  func.func @_if_snn_kernel(%arg0: i32, %arg1: memref<4x8x128xf32, #tpu.memory_space<vmem>>, %arg2: memref<4x8x128xf32, #tpu.memory_space<vmem>>) attributes {dimension_semantics = [#tpu.dimension_semantics<parallel>], iteration_bounds = array<i64: 2>, scalar_prefetch = 0 : i64, scratch_operands = 0 : i64, tpu.core_type = #tpu.core_type<tc>, window_params = [{transform_indices = @transform_0, window_bounds = array<i64: 4, 8, 128>}, {transform_indices = @transform_1, window_bounds = array<i64: 4, 8, 128>}]} {
    %cst = arith.constant 4.000000e+00 : f32
    %0 = vector.broadcast %cst : f32 to vector<8x128xf32>
    %cst_0 = arith.constant 0.000000e+00 : f32
    %1 = vector.broadcast %cst_0 : f32 to vector<8x128xf32>
    %c0 = arith.constant 0 : index
    %c0_1 = arith.constant 0 : index
    %c0_2 = arith.constant 0 : index
    %2 = vector.load %arg1[%c0, %c0_1, %c0_2] : memref<4x8x128xf32, #tpu.memory_space<vmem>>, vector<1x8x128xf32>
    %3 = vector.shape_cast %2 : vector<1x8x128xf32> to vector<8x128xf32>
    %4 = arith.addf %0, %3 : vector<8x128xf32>
    %cst_3 = arith.constant 8.000000e+00 : f32
    %5 = vector.broadcast %cst_3 : f32 to vector<8x128xf32>
    %6 = arith.subf %4, %5 : vector<8x128xf32>
    %cst_4 = arith.constant 0.000000e+00 : f32
    %7 = vector.broadcast %cst_4 : f32 to vector<8x128xf32>
    %8 = arith.cmpf oge, %6, %7 : vector<8x128xf32>
    %9 = arith.extui %8 : vector<8x128xi1> to vector<8x128xi32>
    %10 = arith.sitofp %9 : vector<8x128xi32> to vector<8x128xf32>
    %cst_5 = arith.constant 8.000000e+00 : f32
    %11 = vector.broadcast %cst_5 : f32 to vector<8x128xf32>
    %12 = arith.mulf %10, %11 : vector<8x128xf32>
    %13 = arith.subf %4, %12 : vector<8x128xf32>
    %14 = arith.addf %1, %10 : vector<8x128xf32>
    %c0_6 = arith.constant 0 : index
    %c0_7 = arith.constant 0 : index
    %c0_8 = arith.constant 0 : index
    %15 = vector.load %arg2[%c0_6, %c0_7, %c0_8] : memref<4x8x128xf32, #tpu.memory_space<vmem>>, vector<1x8x128xf32>
    %16 = vector.shape_cast %15 : vector<1x8x128xf32> to vector<8x128xf32>
    %17 = vector.shape_cast %10 : vector<8x128xf32> to vector<1x8x128xf32>
    tpu.vector_store %arg2[%c0_6, %c0_7, %c0_8], %17 {strides = array<i32>} : memref<4x8x128xf32, #tpu.memory_space<vmem>>, vector<1x8x128xf32>,
    %c1 = arith.constant 1 : index
    %c0_9 = arith.constant 0 : index
    %c0_10 = arith.constant 0 : index
    %18 = vector.load %arg1[%c1, %c0_9, %c0_10] : memref<4x8x128xf32, #tpu.memory_space<vmem>>, vector<1x8x128xf32>
    %19 = vector.shape_cast %18 : vector<1x8x128xf32> to vector<8x128xf32>
    %20 = arith.addf %13, %19 : vector<8x128xf32>
    %cst_11 = arith.constant 8.000000e+00 : f32
    %21 = vector.broadcast %cst_11 : f32 to vector<8x128xf32>
    %22 = arith.subf %20, %21 : vector<8x128xf32>
    %cst_12 = arith.constant 0.000000e+00 : f32
    %23 = vector.broadcast %cst_12 : f32 to vector<8x128xf32>
    %24 = arith.cmpf oge, %22, %23 : vector<8x128xf32>
    %25 = arith.extui %24 : vector<8x128xi1> to vector<8x128xi32>
    %26 = arith.sitofp %25 : vector<8x128xi32> to vector<8x128xf32>
    %cst_13 = arith.constant 8.000000e+00 : f32
    %27 = vector.broadcast %cst_13 : f32 to vector<8x128xf32>
    %28 = arith.mulf %26, %27 : vector<8x128xf32>
    %29 = arith.subf %20, %28 : vector<8x128xf32>
    %30 = arith.addf %14, %26 : vector<8x128xf32>
    %c1_14 = arith.constant 1 : index
    %c0_15 = arith.constant 0 : index
    %c0_16 = arith.constant 0 : index
    %31 = vector.load %arg2[%c1_14, %c0_15, %c0_16] : memref<4x8x128xf32, #tpu.memory_space<vmem>>, vector<1x8x128xf32>
    %32 = vector.shape_cast %31 : vector<1x8x128xf32> to vector<8x128xf32>
    %33 = vector.shape_cast %26 : vector<8x128xf32> to vector<1x8x128xf32>
    tpu.vector_store %arg2[%c1_14, %c0_15, %c0_16], %33 {strides = array<i32>} : memref<4x8x128xf32, #tpu.memory_space<vmem>>, vector<1x8x128xf32>,
    %c2 = arith.constant 2 : index
    %c0_17 = arith.constant 0 : index
    %c0_18 = arith.constant 0 : index
    %34 = vector.load %arg1[%c2, %c0_17, %c0_18] : memref<4x8x128xf32, #tpu.memory_space<vmem>>, vector<1x8x128xf32>
    %35 = vector.shape_cast %34 : vector<1x8x128xf32> to vector<8x128xf32>
    %36 = arith.addf %29, %35 : vector<8x128xf32>
    %cst_19 = arith.constant 8.000000e+00 : f32
    %37 = vector.broadcast %cst_19 : f32 to vector<8x128xf32>
    %38 = arith.subf %36, %37 : vector<8x128xf32>
    %cst_20 = arith.constant 0.000000e+00 : f32
    %39 = vector.broadcast %cst_20 : f32 to vector<8x128xf32>
    %40 = arith.cmpf oge, %38, %39 : vector<8x128xf32>
    %41 = arith.extui %40 : vector<8x128xi1> to vector<8x128xi32>
    %42 = arith.sitofp %41 : vector<8x128xi32> to vector<8x128xf32>
    %cst_21 = arith.constant 8.000000e+00 : f32
    %43 = vector.broadcast %cst_21 : f32 to vector<8x128xf32>
    %44 = arith.mulf %42, %43 : vector<8x128xf32>
    %45 = arith.subf %36, %44 : vector<8x128xf32>
    %46 = arith.addf %30, %42 : vector<8x128xf32>
    %c2_22 = arith.constant 2 : index
    %c0_23 = arith.constant 0 : index
    %c0_24 = arith.constant 0 : index
    %47 = vector.load %arg2[%c2_22, %c0_23, %c0_24] : memref<4x8x128xf32, #tpu.memory_space<vmem>>, vector<1x8x128xf32>
    %48 = vector.shape_cast %47 : vector<1x8x128xf32> to vector<8x128xf32>
    %49 = vector.shape_cast %42 : vector<8x128xf32> to vector<1x8x128xf32>
    tpu.vector_store %arg2[%c2_22, %c0_23, %c0_24], %49 {strides = array<i32>} : memref<4x8x128xf32, #tpu.memory_space<vmem>>, vector<1x8x128xf32>,
    %c3 = arith.constant 3 : index
    %c0_25 = arith.constant 0 : index
    %c0_26 = arith.constant 0 : index
    %50 = vector.load %arg1[%c3, %c0_25, %c0_26] : memref<4x8x128xf32, #tpu.memory_space<vmem>>, vector<1x8x128xf32>
    %51 = vector.shape_cast %50 : vector<1x8x128xf32> to vector<8x128xf32>
    %52 = arith.addf %45, %51 : vector<8x128xf32>
    %cst_27 = arith.constant 8.000000e+00 : f32
    %53 = vector.broadcast %cst_27 : f32 to vector<8x128xf32>
    %54 = arith.subf %52, %53 : vector<8x128xf32>
    %cst_28 = arith.constant 0.000000e+00 : f32
    %55 = vector.broadcast %cst_28 : f32 to vector<8x128xf32>
    %56 = arith.cmpf oge, %54, %55 : vector<8x128xf32>
    %57 = arith.extui %56 : vector<8x128xi1> to vector<8x128xi32>
    %58 = arith.sitofp %57 : vector<8x128xi32> to vector<8x128xf32>
    %cst_29 = arith.constant 8.000000e+00 : f32
    %59 = vector.broadcast %cst_29 : f32 to vector<8x128xf32>
    %60 = arith.mulf %58, %59 : vector<8x128xf32>
    %61 = arith.subf %52, %60 : vector<8x128xf32>
    %62 = arith.addf %46, %58 : vector<8x128xf32>
    %c3_30 = arith.constant 3 : index
    %c0_31 = arith.constant 0 : index
    %c0_32 = arith.constant 0 : index
    %63 = vector.load %arg2[%c3_30, %c0_31, %c0_32] : memref<4x8x128xf32, #tpu.memory_space<vmem>>, vector<1x8x128xf32>
    %64 = vector.shape_cast %63 : vector<1x8x128xf32> to vector<8x128xf32>
    %65 = vector.shape_cast %58 : vector<8x128xf32> to vector<1x8x128xf32>
    tpu.vector_store %arg2[%c3_30, %c0_31, %c0_32], %65 {strides = array<i32>} : memref<4x8x128xf32, #tpu.memory_space<vmem>>, vector<1x8x128xf32>,
    %cst_33 = arith.constant 4.000000e+00 : f32
    %66 = vector.broadcast %cst_33 : f32 to vector<8x128xf32>
    %67 = arith.subf %61, %66 : vector<8x128xf32>
    %cst_34 = arith.constant 8.000000e+00 : f32
    %68 = vector.broadcast %cst_34 : f32 to vector<8x128xf32>
    %69 = arith.mulf %62, %68 : vector<8x128xf32>
    %70 = arith.addf %67, %69 : vector<8x128xf32>
    %cst_35 = arith.constant 3.200000e+01 : f32
    %71 = vector.broadcast %cst_35 : f32 to vector<8x128xf32>
    %72 = arith.minimumf %70, %71 : vector<8x128xf32>
    %cst_36 = arith.constant 0.000000e+00 : f32
    %73 = vector.broadcast %cst_36 : f32 to vector<8x128xf32>
    %74 = arith.cmpf ogt, %72, %73 : vector<8x128xf32>
    %cst_37 = arith.constant 0.000000e+00 : f32
    %75 = vector.broadcast %cst_37 : f32 to vector<8x128xf32>
    %76 = arith.cmpf ogt, %62, %75 : vector<8x128xf32>
    %77 = arith.andi %74, %76 : vector<8x128xi1>
    %cst_38 = arith.constant 1.000000e+00 : f32
    %78 = vector.broadcast %cst_38 : f32 to vector<8x128xf32>
    %79 = arith.maximumf %62, %78 : vector<8x128xf32>
    %80 = arith.divf %72, %79 : vector<8x128xf32>
    %cst_39 = arith.constant 0.000000e+00 : f32
    %81 = vector.broadcast %cst_39 : f32 to vector<8x128xf32>
    %82 = arith.select %77, %80, %81 : vector<8x128xi1>, vector<8x128xf32>
    %c0_40 = arith.constant 0 : index
    %c0_41 = arith.constant 0 : index
    %c0_42 = arith.constant 0 : index
    %83 = vector.load %arg2[%c0_40, %c0_41, %c0_42] : memref<4x8x128xf32, #tpu.memory_space<vmem>>, vector<1x8x128xf32>
    %84 = vector.shape_cast %83 : vector<1x8x128xf32> to vector<8x128xf32>
    %85 = arith.mulf %84, %82 : vector<8x128xf32>
    %c0_43 = arith.constant 0 : index
    %c0_44 = arith.constant 0 : index
    %c0_45 = arith.constant 0 : index
    %86 = vector.load %arg2[%c0_43, %c0_44, %c0_45] : memref<4x8x128xf32, #tpu.memory_space<vmem>>, vector<1x8x128xf32>
    %87 = vector.shape_cast %86 : vector<1x8x128xf32> to vector<8x128xf32>
    %88 = vector.shape_cast %85 : vector<8x128xf32> to vector<1x8x128xf32>
    tpu.vector_store %arg2[%c0_43, %c0_44, %c0_45], %88 {strides = array<i32>} : memref<4x8x128xf32, #tpu.memory_space<vmem>>, vector<1x8x128xf32>,
    %c1_46 = arith.constant 1 : index
    %c0_47 = arith.constant 0 : index
    %c0_48 = arith.constant 0 : index
    %89 = vector.load %arg2[%c1_46, %c0_47, %c0_48] : memref<4x8x128xf32, #tpu.memory_space<vmem>>, vector<1x8x128xf32>
    %90 = vector.shape_cast %89 : vector<1x8x128xf32> to vector<8x128xf32>
    %91 = arith.mulf %90, %82 : vector<8x128xf32>
    %c1_49 = arith.constant 1 : index
    %c0_50 = arith.constant 0 : index
    %c0_51 = arith.constant 0 : index
    %92 = vector.load %arg2[%c1_49, %c0_50, %c0_51] : memref<4x8x128xf32, #tpu.memory_space<vmem>>, vector<1x8x128xf32>
    %93 = vector.shape_cast %92 : vector<1x8x128xf32> to vector<8x128xf32>
    %94 = vector.shape_cast %91 : vector<8x128xf32> to vector<1x8x128xf32>
    tpu.vector_store %arg2[%c1_49, %c0_50, %c0_51], %94 {strides = array<i32>} : memref<4x8x128xf32, #tpu.memory_space<vmem>>, vector<1x8x128xf32>,
    %c2_52 = arith.constant 2 : index
    %c0_53 = arith.constant 0 : index
    %c0_54 = arith.constant 0 : index
    %95 = vector.load %arg2[%c2_52, %c0_53, %c0_54] : memref<4x8x128xf32, #tpu.memory_space<vmem>>, vector<1x8x128xf32>
    %96 = vector.shape_cast %95 : vector<1x8x128xf32> to vector<8x128xf32>
    %97 = arith.mulf %96, %82 : vector<8x128xf32>
    %c2_55 = arith.constant 2 : index
    %c0_56 = arith.constant 0 : index
    %c0_57 = arith.constant 0 : index
    %98 = vector.load %arg2[%c2_55, %c0_56, %c0_57] : memref<4x8x128xf32, #tpu.memory_space<vmem>>, vector<1x8x128xf32>
    %99 = vector.shape_cast %98 : vector<1x8x128xf32> to vector<8x128xf32>
    %100 = vector.shape_cast %97 : vector<8x128xf32> to vector<1x8x128xf32>
    tpu.vector_store %arg2[%c2_55, %c0_56, %c0_57], %100 {strides = array<i32>} : memref<4x8x128xf32, #tpu.memory_space<vmem>>, vector<1x8x128xf32>,
    %c3_58 = arith.constant 3 : index
    %c0_59 = arith.constant 0 : index
    %c0_60 = arith.constant 0 : index
    %101 = vector.load %arg2[%c3_58, %c0_59, %c0_60] : memref<4x8x128xf32, #tpu.memory_space<vmem>>, vector<1x8x128xf32>
    %102 = vector.shape_cast %101 : vector<1x8x128xf32> to vector<8x128xf32>
    %103 = arith.mulf %102, %82 : vector<8x128xf32>
    %c3_61 = arith.constant 3 : index
    %c0_62 = arith.constant 0 : index
    %c0_63 = arith.constant 0 : index
    %104 = vector.load %arg2[%c3_61, %c0_62, %c0_63] : memref<4x8x128xf32, #tpu.memory_space<vmem>>, vector<1x8x128xf32>
    %105 = vector.shape_cast %104 : vector<1x8x128xf32> to vector<8x128xf32>
    %106 = vector.shape_cast %103 : vector<8x128xf32> to vector<1x8x128xf32>
    tpu.vector_store %arg2[%c3_61, %c0_62, %c0_63], %106 {strides = array<i32>} : memref<4x8x128xf32, #tpu.memory_space<vmem>>, vector<1x8x128xf32>,
    return
  }
  func.func @transform_0(%arg0: i32) -> (i32, i32, i32) {
    %c0_i32 = arith.constant 0 : i32
    %c0_i32_0 = arith.constant 0 : i32
    %c0_i32_1 = arith.constant 0 : i32
    return %c0_i32, %arg0, %c0_i32_0 : i32, i32, i32
  }
  func.func @transform_1(%arg0: i32) -> (i32, i32, i32) {
    %c0_i32 = arith.constant 0 : i32
    %c0_i32_0 = arith.constant 0 : i32
    %c0_i32_1 = arith.constant 0 : i32
    return %c0_i32, %arg0, %c0_i32_0 : i32, i32, i32
  }
}

</mosaic_0001>

<llo_original>
// kernel: tpu_custom_call.1
$region0: #{tpu_custom_call.1}
  #allocation0 [shape = 'u32[]', space=smem, size = 0x4, offset = 0x4, fixed_abs, tag = 'smem constant byte address 0x4 - core index']
  #allocation1 [shape = 'u32[72,128]{1,0:T(1,128)}', space=vmem, size = 0x9000, scoped, tag = 'internal scratch']
  %s0 = inlined_call_operand.hbm [shape: f32[4,16,128], index: 0, kind: input, shape index: {}]
  %s1 = inlined_call_operand.hbm [shape: f32[4,16,128], index: 1, kind: output, shape index: {}]
  %s2 = sld [smem:[#allocation0]]
  $region41: #{tpu_custom_call.1} parent=0
    _
  %s4 = ssub.s32 1, %s2
  %s5 = scalar_select 0, %s4, %s2
  $region1: #{tpu_custom_call.1} parent=0
    #allocation2 [shape = 'u8[32768]{0}', space=vmem, size = 0x8000, scoped, tag = 'input window, operand 0']
    #allocation3 [shape = 's32[2]{0}', space=sflag, size = 0x8, scoped, tag = 'scoped memory for tpu_custom_call.1']
    #allocation4 [shape = 's32[2]{0}', space=sflag, size = 0x8, scoped, tag = 'scoped memory for tpu_custom_call.1']
    #allocation5 [shape = 'u8[32768]{0}', space=vmem, size = 0x8000, scoped, tag = 'output window, operand 0']
    %6 = vsyncpa [#allocation3], 0
    %s7 = scalar_lea.sflag [#allocation3], 1
    %8 = vsyncpa %s7, 0
    %9 = vsyncpa [#allocation4], 0
    %s10 = scalar_lea.sflag [#allocation4], 1
    %11 = vsyncpa %s10, 0
    loop: start=0, step=1, limit=4
    $region2: #{tpu_custom_call.1} parent=1 // loop_pre_header
      _
    $region3: #{tpu_custom_call.1} parent=1 // loop_header
      %s13 = sphi 0, %s17
      %p14 = scmp.ge.s32.totalorder %s13, 4
      %s23 = sphi 0, %s25
      %s26 = sphi 0, %s23
      %s27 = sphi 0, %s26
      %s43 = sphi 0, %s27
      %s49 = sphi 0, %s51
      %s52 = sphi 0, %s49
      %s53 = sphi 0, %s52
      %s69 = sphi 0, %s53
    $region4: #{tpu_custom_call.1} parent=1 // loop_header_branch
      %16 = sbr.rel (%p14) target = $region8
    $region5: #{tpu_custom_call.1} parent=1 // loop_body
      %s18 = ssub.s32 %s13, 1
      %s19 = ssub.s32 %s13, 2
      %s20 = sadd.s32 %s13, 1
      %s21 = ssub.s32 %s13, %s20
      %p22 = scmp.eq.s32.totalorder %s21, 0
      %s24 = sadd.s32 %s23, 1
      %s25 = scalar_select %p22, %s23, %s24
      %p28 = pneg %p22
      %p29 = scmp.eq.s32.totalorder %s13, 1
      %p30 = por %p28, %p29
      %p31 = scmp.ne.s32.totalorder %s23, %s26
      %p32 = scmp.eq.s32.totalorder %s13, 0
      %p33 = por %p31, %p32
      %p34 = scmp.ne.s32.totalorder %s23, %s26
      %p35 = scmp.eq.s32.totalorder %s18, 1
      %p36 = por %p34, %p35
      %p37 = scmp.ne.s32.totalorder %s26, %s27
      %p38 = scmp.eq.s32.totalorder %s18, 0
      %p39 = por %p37, %p38
      %p40 = scmp.ne.s32.totalorder %s26, %s27
      %p41 = scmp.eq.s32.totalorder %s19, 1
      %p42 = por %p40, %p41
      %p44 = scmp.ne.s32.totalorder %s27, %s43
      %p45 = scmp.eq.s32.totalorder %s19, 0
      %p46 = por %p44, %p45
      %s47 = ssub.s32 %s13, %s20
      %p48 = scmp.eq.s32.totalorder %s47, 0
      %s50 = sadd.s32 %s49, 1
      %s51 = scalar_select %p48, %s49, %s50
      %p54 = pneg %p48
      %p55 = scmp.eq.s32.totalorder %s13, 1
      %p56 = por %p54, %p55
      %p57 = scmp.ne.s32.totalorder %s49, %s52
      %p58 = scmp.eq.s32.totalorder %s13, 0
      %p59 = por %p57, %p58
      %p60 = scmp.ne.s32.totalorder %s49, %s52
      %p61 = scmp.eq.s32.totalorder %s18, 1
      %p62 = por %p60, %p61
      %p63 = scmp.ne.s32.totalorder %s52, %s53
      %p64 = scmp.eq.s32.totalorder %s18, 0
      %p65 = por %p63, %p64
      %p66 = scmp.ne.s32.totalorder %s52, %s53
      %p67 = scmp.eq.s32.totalorder %s19, 1
      %p68 = por %p66, %p67
      %p70 = scmp.ne.s32.totalorder %s53, %s69
      %p71 = scmp.eq.s32.totalorder %s19, 0
      %p72 = por %p70, %p71
      %p73 = scmp.le.s32.totalorder 1, %s13
      %p74 = scmp.lt.s32.totalorder %s13, 3
      %p75 = pnand %p73, %p74
      %p76 = pneg %p75
      // Predicated region
      $region9: #{tpu_custom_call.1} parent=5 // pred_check
        _
      $region10: #{tpu_custom_call.1} parent=5 // pred_check_branch
        %78 = sbr.rel (%p75) target = $region12
      $region11: #{tpu_custom_call.1} parent=5 // pred_region
        %s79 = ssub.s32 %s13, 1
      $region12: #{tpu_custom_call.1} parent=5 // pred_fallthru
        _
      %p80 = scmp.lt.s32.totalorder %s13, 2
      // Predicated region
      $region13: #{tpu_custom_call.1} parent=5 // pred_check
        %p81 = pneg %p80
      $region14: #{tpu_custom_call.1} parent=5 // pred_check_branch
        %83 = sbr.rel (%p81) target = $region16
      $region15: #{tpu_custom_call.1} parent=5 // pred_region
        // Predicated region
        $region17: #{tpu_custom_call.1} parent=15 // pred_check
          %p84 = pneg %p33
        $region18: #{tpu_custom_call.1} parent=15 // pred_check_branch
          %86 = sbr.rel (%p84) target = $region20
        $region19: #{tpu_custom_call.1} parent=15 // pred_region
          %s87 = sand.u32 %s23, 1
          %s88 = scalar_lea.sflag [#allocation3], %s87
          %s89 = sand.u32 %s23, 1
          %s90 = smul.addr %s89, 32
          %s91 = scalar_lea.vmem [#allocation2], %s90
          %93 = vsyncadd %s88, 0
          %s94 = smul.addr %s13, 8
          %s95 = scalar_lea.hbm %s0, %s94
          %s96 = sshll.u32 %s95, 4
          %s97 = int_to_ptr.hbm [resolvable:$true] %s96
          %s98 = sshll.u32 %s91, 4
          %s99 = int_to_ptr.vmem [resolvable:$true] %s98
          %104 = dma.hbm_to_vmem [thread:$0]  %s97, 512, %s99, %s88, 256, 128, 8
        $region20: #{tpu_custom_call.1} parent=15 // pred_fallthru
          _
      $region16: #{tpu_custom_call.1} parent=5 // pred_fallthru
        _
      %p105 = scmp.le.s32.totalorder 1, %s13
      %p106 = scmp.lt.s32.totalorder %s13, 3
      %p107 = pnand %p105, %p106
      %p108 = pneg %p107
      // Predicated region
      $region21: #{tpu_custom_call.1} parent=5 // pred_check
        _
      $region22: #{tpu_custom_call.1} parent=5 // pred_check_branch
        %110 = sbr.rel (%p107) target = $region24
      $region23: #{tpu_custom_call.1} parent=5 // pred_region
        %s111 = ssub.s32 %s13, 1
        %s112 = sand.u32 %s26, 1
        %s113 = scalar_lea.sflag [#allocation3], %s112
        %s114 = sand.u32 %s26, 1
        %s115 = smul.addr %s114, 32
        %s116 = scalar_lea.vmem [#allocation2], %s115
        // Predicated region
        $region25: #{tpu_custom_call.1} parent=23 // pred_check
          %p117 = pneg %p39
        $region26: #{tpu_custom_call.1} parent=23 // pred_check_branch
          %119 = sbr.rel (%p117) target = $region28
        $region27: #{tpu_custom_call.1} parent=23 // pred_region
          %121 = dma.done %s113, 512
        $region28: #{tpu_custom_call.1} parent=23 // pred_fallthru
          _
        %s122 = sand.u32 %s26, 1
        %s123 = scalar_lea.sflag [#allocation3], %s122
        %s124 = sand.u32 %s26, 1
        %s125 = smul.addr %s124, 32
        %s126 = scalar_lea.vmem [#allocation2], %s125
        %p127 = pneg %p39
        %p128 = pneg %p36
        %p129 = pneg %p65
        %p130 = pneg %p62
        %s131 = sand.u32 %s52, 1
        %s132 = scalar_lea.sflag [#allocation4], %s131
        %s133 = sand.u32 %s52, 1
        %s134 = smul.addr %s133, 32
        %s135 = scalar_lea.vmem [#allocation5], %s134
        %v136 = vld [vmem:[%s116] sm:$0xff]
        %v137 = vadd.f32 %v136, 4.0
        %v138 = vsub.f32 %v137, 8.0
        %vm139 = vcmp.ge.f32.partialorder %v138, 0.0
        %v140 = vsel %vm139, 1, 0
        %v141 = vcvt.s32.f32 %v140
        %v142 = vmul.f32 %v141, 8.0
        %v143 = vsub.f32 %v137, %v142
        %v144 = vadd.f32 %v141, 0.0
        %145 = vst [vmem:[%s135] sm:$0xff] %v141
        %s146 = scalar_lea.vmem %s116, 8 [#allocation2]
        %v147 = vld [vmem:[%s146] sm:$0xff]
        %v148 = vadd.f32 %v143, %v147
        %v149 = vsub.f32 %v148, 8.0
        %vm150 = vcmp.ge.f32.partialorder %v149, 0.0
        %v151 = vsel %vm150, 1, 0
        %v152 = vcvt.s32.f32 %v151
        %v153 = vmul.f32 %v152, 8.0
        %v154 = vsub.f32 %v148, %v153
        %v155 = vadd.f32 %v144, %v152
        %s156 = scalar_lea.vmem %s135, 8 [#allocation5]
        %157 = vst [vmem:[%s156] sm:$0xff] %v152
        %s158 = scalar_lea.vmem %s116, 16 [#allocation2]
        %v159 = vld [vmem:[%s158] sm:$0xff]
        %v160 = vadd.f32 %v154, %v159
        %v161 = vsub.f32 %v160, 8.0
        %vm162 = vcmp.ge.f32.partialorder %v161, 0.0
        %v163 = vsel %vm162, 1, 0
        %v164 = vcvt.s32.f32 %v163
        %v165 = vmul.f32 %v164, 8.0
        %v166 = vsub.f32 %v160, %v165
        %v167 = vadd.f32 %v155, %v164
        %s168 = scalar_lea.vmem %s135, 16 [#allocation5]
        %169 = vst [vmem:[%s168] sm:$0xff] %v164
        %s170 = scalar_lea.vmem %s116, 24 [#allocation2]
        %v171 = vld [vmem:[%s170] sm:$0xff]
        %v172 = vadd.f32 %v166, %v171
        %v173 = vsub.f32 %v172, 8.0
        %vm174 = vcmp.ge.f32.partialorder %v173, 0.0
        %v175 = vsel %vm174, 1, 0
        %v176 = vcvt.s32.f32 %v175
        %v177 = vmul.f32 %v176, 8.0
        %v178 = vsub.f32 %v172, %v177
        %v179 = vadd.f32 %v167, %v176
        %s180 = scalar_lea.vmem %s135, 24 [#allocation5]
        %181 = vst [vmem:[%s180] sm:$0xff] %v176
        %v182 = vsub.f32 %v178, 4.0
        %v183 = vmul.f32 %v179, 8.0
        %v184 = vadd.f32 %v182, %v183
        %v185 = vmin.f32 %v184, 32.0
        %vm186 = vcmp.gt.f32.partialorder %v185, 0.0
        %vm187 = vcmp.gt.f32.partialorder %v179, 0.0
        %vm188 = vmand %vm186, %vm187
        %v189 = vmax.f32 %v179, 1.0
        %v190 = vrcp.pop %v189
        %v191 = vmul.f32 %v189, %v190
        %v192 = vsub.f32 1.0, %v191
        %v193 = vmul.f32 %v190, %v192
        %v194 = vadd.f32 %v190, %v193
        %vm195 = vweird.f32 %v189
        %vm196 = vweird.f32 %v190
        %vm197 = vmor %vm195, %vm196
        %v198 = vsel %vm197, %v190, %v194
        %v199 = vand.u32 2147483647, %v189
        %vm200 = vcmp.eq.f32.partialorder %v199, 8.507059e+37
        %v201 = vand.u32 %v189, 2147483648
        %v202 = vor.u32 1.1754944e-38, %v201
        %v203 = vsel %vm200, %v202, %v198
        %v204 = vmul.f32 %v185, %v203
        %v205 = vsel %vm188, %v204, 0.0
        %v206 = vld [vmem:[%s135] sm:$0xff]
        %v207 = vmul.f32 %v206, %v205
        %208 = vst [vmem:[%s135] sm:$0xff] %v207
        %v209 = vld [vmem:[%s156] sm:$0xff]
        %v210 = vmul.f32 %v209, %v205
        %211 = vst [vmem:[%s156] sm:$0xff] %v210
        %v212 = vld [vmem:[%s168] sm:$0xff]
        %v213 = vmul.f32 %v212, %v205
        %214 = vst [vmem:[%s168] sm:$0xff] %v213
        %v215 = vld [vmem:[%s180] sm:$0xff]
        %v216 = vmul.f32 %v215, %v205
        %217 = vst [vmem:[%s180] sm:$0xff] %v216
        %s218 = sand.u32 %s52, 1
        %s219 = scalar_lea.sflag [#allocation4], %s218
        %s220 = sand.u32 %s52, 1
        %s221 = smul.addr %s220, 32
        %s222 = scalar_lea.vmem [#allocation5], %s221
        // Predicated region
        $region29: #{tpu_custom_call.1} parent=23 // pred_check
          %p223 = pneg %p62
        $region30: #{tpu_custom_call.1} parent=23 // pred_check_branch
          %225 = sbr.rel (%p223) target = $region32
        $region31: #{tpu_custom_call.1} parent=23 // pred_region
          %227 = vsyncadd %s219, 0
          %s228 = smul.addr %s18, 8
          %s229 = scalar_lea.hbm %s1, %s228
          %s230 = sshll.u32 %s222, 4
          %s231 = int_to_ptr.vmem [resolvable:$true] %s230
          %s232 = sshll.u32 %s229, 4
          %s233 = int_to_ptr.hbm [resolvable:$true] %s232
          %238 = dma.vmem_to_hbm [thread:$0]  %s231, 512, %s233, %s219, 128, 256, 8
        $region32: #{tpu_custom_call.1} parent=23 // pred_fallthru
          _
      $region24: #{tpu_custom_call.1} parent=5 // pred_fallthru
        _
      %p239 = scmp.le.s32.totalorder 2, %s13
      // Predicated region
      $region33: #{tpu_custom_call.1} parent=5 // pred_check
        %p240 = pneg %p239
      $region34: #{tpu_custom_call.1} parent=5 // pred_check_branch
        %242 = sbr.rel (%p240) target = $region36
      $region35: #{tpu_custom_call.1} parent=5 // pred_region
        %s243 = ssub.s32 %s13, 2
        // Predicated region
        $region37: #{tpu_custom_call.1} parent=35 // pred_check
          %p244 = pneg %p68
        $region38: #{tpu_custom_call.1} parent=35 // pred_check_branch
          %246 = sbr.rel (%p244) target = $region40
        $region39: #{tpu_custom_call.1} parent=35 // pred_region
          %s247 = sand.u32 %s53, 1
          %s248 = scalar_lea.sflag [#allocation4], %s247
          %s249 = sand.u32 %s53, 1
          %s250 = smul.addr %s249, 32
          %s251 = scalar_lea.vmem [#allocation5], %s250
          %253 = dma.done %s248, 512
        $region40: #{tpu_custom_call.1} parent=35 // pred_fallthru
          _
      $region36: #{tpu_custom_call.1} parent=5 // pred_fallthru
        _
    $region6: #{tpu_custom_call.1} parent=1 // loop_footer
      %s17 = sadd.s32 1, %s13
    $region7: #{tpu_custom_call.1} parent=1 // loop_footer_branch
      %12 = sbr.rel target = $region3
    $region8: #{tpu_custom_call.1} parent=1 // loop_exit
      _
    %254 = vsyncpa [#allocation3], 1
    %s255 = scalar_lea.sflag [#allocation3], 1
    %256 = vsyncpa %s255, 1
    %257 = vsyncpa [#allocation4], 1
    %s258 = scalar_lea.sflag [#allocation4], 1
    %259 = vsyncpa %s258, 1

</llo_original>
